<compile_context>
chip_gen: v6e
topology: v6e:2x2x1
jax: 0.10.0
libtpu: 0.0.40
codegen_flags: <defaults>
</compile_context>

<pallas_src>
import functools

import jax
import jax.numpy as jnp
from jax import lax
from jax.experimental import pallas as pl
from jax.experimental.pallas import tpu as pltpu


def _round_up(x, m):
    return ((x + m - 1) // m) * m


def _pick_tile(n_pad, d_pad):
    """Largest 128-multiple tile that divides n_pad and fits a ~24 MiB working set."""
    for t in (512, 256, 128):
        if n_pad % t:
            continue
        feat_bytes = 2 * 2 * (2 * t * d_pad)      # 2 feature inputs, double-buffered, bf16
        work_bytes = 6 * t * t * 4                # a few live f32 [t, t] temporaries
        if feat_bytes + work_bytes <= 24 * 1024 * 1024:
            return t
    return 128


def _ntxent_kernel(af_ref, cf_ref, agid_ref, cgid_ref, out_ref,
                   m_ref, l_ref, s_ref, c_ref, *,
                   inv_temp, loss_scale, n_valid, has_pad):
    """One (row_tile i, col_tile j) step of the online NT-Xent reduction.

    af_ref:   [ta, D]  anchor features (bf16), anchors end up on lanes of adc
    cf_ref:   [tc, D]  contrast features (bf16)
    agid_ref: [1, ta]  anchor group ids (int32)
    cgid_ref: [tc, 1]  contrast group ids (int32)
    out_ref:  [1, ta]  per-anchor loss (written at the last col step only)
    scratch:  m (running max), l (running sum-exp), s (sum mask*adc), c (sum mask)
    """
    i = pl.program_id(0)
    j = pl.program_id(1)
    ta = af_ref.shape[0]
    tc = cf_ref.shape[0]

    @pl.when(j == 0)
    def _init():
        m_ref[...] = jnp.full_like(m_ref, -jnp.inf)
        l_ref[...] = jnp.zeros_like(l_ref)
        s_ref[...] = jnp.zeros_like(s_ref)
        c_ref[...] = jnp.zeros_like(c_ref)

    # adc[c, a] = <f_c, f_a> / temperature   (contrast on sublanes, anchors on lanes).
    # Both contracting dims are last -> feeds the MXU with no transpose; f32 accumulate.
    adc = lax.dot_general(
        cf_ref[...], af_ref[...],
        dimension_numbers=(((1,), (1,)), ((), ())),
        preferred_element_type=jnp.float32,
    ) * inv_temp                                                    # [tc, ta] f32

    # Self-exclusion: one per-tile index comparison (no NxN iotas); padded contrast
    # rows are only masked when padding actually exists (static flag).
    c_idx = j * tc + lax.broadcasted_iota(jnp.int32, (tc, ta), 0)
    a_idx = i * ta + lax.broadcasted_iota(jnp.int32, (tc, ta), 1)
    keep = c_idx != a_idx
    if has_pad:
        keep = keep & (c_idx < n_valid)

    # Positive mask from group-id equality (replaces the HBM-materialized [N,N] mask).
    pos = (cgid_ref[...] == agid_ref[...]) & keep                   # [tc, ta] bool

    # Online logsumexp over the contrast (sublane) axis; exactly one exp per element.
    m_prev = m_ref[...]                                             # [1, ta]
    m_new = jnp.maximum(m_prev, jnp.max(adc, axis=0, keepdims=True))
    alpha = jnp.exp(m_prev - m_new)
    e = jnp.where(keep, jnp.exp(adc - m_new), 0.0)
    l_ref[...] = alpha * l_ref[...] + jnp.sum(e, axis=0, keepdims=True)
    s_ref[...] += jnp.sum(jnp.where(pos, adc, 0.0), axis=0, keepdims=True)
    c_ref[...] += jnp.sum(pos.astype(jnp.float32), axis=0, keepdims=True)
    m_ref[...] = m_new

    @pl.when(j == pl.num_programs(1) - 1)
    def _finalize():
        lse = m_ref[...] + jnp.log(l_ref[...])                      # [1, ta]
        cnt = c_ref[...]
        cnt_safe = jnp.where(cnt > 0.0, cnt, 1.0)   # guard anchors with no positives
        mean_log_prob_pos = (s_ref[...] - cnt * lse) / cnt_safe
        out_ref[...] = loss_scale * mean_log_prob_pos               # lane-dense store


def ntxent_loss(features, labels=None, mask=None, temperature=0.07,
                contrast_mode='all', base_temperature=0.07):
    """JAX/Pallas equivalent of NTXentLoss.forward (SimCLR and labels paths)."""
    if features.ndim < 3:
        raise ValueError('`features` needs to be [bsz, n_views, ...]')
    if features.ndim > 3:
        features = features.reshape(features.shape[0], features.shape[1], -1)
    bsz, n_views, d = features.shape

    if labels is not None and mask is not None:
        raise ValueError('Cannot define both `labels` and `mask`')
    if mask is not None:
        # TODO(synk): arbitrary [bsz, bsz] masks are not expressible as group-id
        # equality; only the SimCLR / labels paths are wired through the Pallas kernel.
        raise NotImplementedError('explicit `mask` not supported by the Pallas path')
    if labels is not None:
        labels = jnp.asarray(labels).reshape(-1)
        if labels.shape[0] != bsz:
            raise ValueError('Num of labels does not match num of features')
        gid = labels.astype(jnp.int32)
    else:
        gid = jnp.arange(bsz, dtype=jnp.int32)

    if contrast_mode == 'one':
        # TODO(synk): 'one' mode (rectangular [bsz, N] logits) not wired through Pallas.
        raise NotImplementedError("contrast_mode='one' not implemented in Pallas path")
    if contrast_mode != 'all':
        raise ValueError('Unknown mode: {}'.format(contrast_mode))

    n = n_views * bsz
    # contrast_feature = cat(unbind(features, 1), 0): view-major [N, D].  bf16 halves
    # the feature DMA; matmul accumulation stays in f32 inside the kernel.
    cf = jnp.transpose(features, (1, 0, 2)).reshape(n, d).astype(jnp.bfloat16)
    gid_n = jnp.tile(gid, n_views)                                  # [N]

    # Pad N and D to multiples of 128 (lane-dense tiles; zero-padded rows never become
    # positives and are removed from the softmax denominator in-kernel).
    n_pad = _round_up(n, 128)
    d_pad = _round_up(d, 128)
    cf = jnp.pad(cf, ((0, n_pad - n), (0, d_pad - d)))
    gid_n = jnp.pad(gid_n, (0, n_pad - n), constant_values=-1)

    tile = _pick_tile(n_pad, d_pad)
    ni = nj = n_pad // tile

    kernel = functools.partial(
        _ntxent_kernel,
        inv_temp=float(1.0 / temperature),
        loss_scale=float(-(temperature / base_temperature)),
        n_valid=n,
        has_pad=(n_pad != n),
    )

    per_anchor = pl.pallas_call(
        kernel,
        out_shape=jax.ShapeDtypeStruct((1, n_pad), jnp.float32),
        grid=(ni, nj),
        in_specs=[
            pl.BlockSpec((tile, d_pad), lambda i, j: (i, 0)),   # anchor feature rows
            pl.BlockSpec((tile, d_pad), lambda i, j: (j, 0)),   # contrast feature rows
            pl.BlockSpec((1, tile), lambda i, j: (0, i)),       # anchor group ids
            pl.BlockSpec((tile, 1), lambda i, j: (j, 0)),       # contrast group ids
        ],
        out_specs=pl.BlockSpec((1, tile), lambda i, j: (0, i)),
        scratch_shapes=[pltpu.VMEM((1, tile), jnp.float32)] * 4,
        compiler_params=pltpu.CompilerParams(
            dimension_semantics=("parallel", "arbitrary"),
            vmem_limit_bytes=40 * 1024 * 1024,
        ),
    )(cf, cf, gid_n[None, :], gid_n[:, None])

    # Final mean over the real anchors in the wrapper (keeps row tiles independent).
    return jnp.mean(per_anchor[0, :n])


def _ntxent_reference(features, labels=None, temperature=0.07, base_temperature=0.07):
    """Pure-JAX f32 reference mirroring the PyTorch forward."""
    bsz, n_views, d = features.shape
    if labels is None:
        base_mask = jnp.eye(bsz, dtype=jnp.float32)
    else:
        labels = jnp.asarray(labels).reshape(-1, 1)
        base_mask = (labels == labels.T).astype(jnp.float32)
    n = n_views * bsz
    cf = jnp.transpose(features, (1, 0, 2)).reshape(n, d).astype(jnp.float32)
    adc = (cf @ cf.T) / temperature
    logits = adc - jnp.max(adc, axis=1, keepdims=True)
    logits_mask = 1.0 - jnp.eye(n, dtype=jnp.float32)
    pos_mask = jnp.tile(base_mask, (n_views, n_views)) * logits_mask
    exp_logits = jnp.exp(logits) * logits_mask
    log_prob = logits - jnp.log(jnp.sum(exp_logits, axis=1, keepdims=True))
    mean_log_prob_pos = jnp.sum(pos_mask * log_prob, axis=1) / jnp.sum(pos_mask, axis=1)
    return jnp.mean(-(temperature / base_temperature) * mean_log_prob_pos)


if __name__ == "__main__":
    key = jax.random.PRNGKey(0)
    bsz, n_views, d = 8, 2, 32
    k1, k2 = jax.random.split(key)
    features = jax.random.normal(k1, (bsz, n_views, d), dtype=jnp.float32)
    # L2-normalize along the feature dim (standard SupCon/SimCLR usage).
    features = features / jnp.linalg.norm(features, axis=-1, keepdims=True)

    # Unsupervised (SimCLR) path.
    loss = jax.block_until_ready(ntxent_loss(features))
    ref = jax.block_until_ready(_ntxent_reference(features))
    assert jnp.isfinite(loss), "loss is not finite"
    assert jnp.allclose(loss, ref, rtol=2e-2, atol=2e-2), (loss, ref)

    # Supervised (labels) path.
    labels = jax.random.randint(k2, (bsz,), 0, 4)
    loss_sup = jax.block_until_ready(ntxent_loss(features, labels=labels))
    ref_sup = jax.block_until_ready(_ntxent_reference(features, labels=labels))
    assert jnp.isfinite(loss_sup), "supervised loss is not finite"
    assert jnp.allclose(loss_sup, ref_sup, rtol=2e-2, atol=2e-2), (loss_sup, ref_sup)

    print("KERNEL_OK")
</pallas_src>

<mosaic_0001>
module attributes {stable_mosaic.version = 11 : i64} {
  func.func @_ntxent_kernel(%arg0: i32, %arg1: i32, %arg2: memref<128x128xbf16, #tpu.memory_space<vmem>>, %arg3: memref<128x128xbf16, #tpu.memory_space<vmem>>, %arg4: memref<1x128xi32, #tpu.memory_space<vmem>>, %arg5: memref<128x1xi32, #tpu.memory_space<vmem>>, %arg6: memref<1x128xf32, #tpu.memory_space<vmem>>, %arg7: memref<1x128xf32, #tpu.memory_space<vmem>>, %arg8: memref<1x128xf32, #tpu.memory_space<vmem>>, %arg9: memref<1x128xf32, #tpu.memory_space<vmem>>, %arg10: memref<1x128xf32, #tpu.memory_space<vmem>>) attributes {dimension_semantics = [#tpu.dimension_semantics<parallel>, #tpu.dimension_semantics<arbitrary>], iteration_bounds = array<i64: 1, 1>, scalar_prefetch = 0 : i64, scratch_operands = 4 : i64, tpu.core_type = #tpu.core_type<tc>, window_params = [{transform_indices = @transform_0, window_bounds = array<i64: 128, 128>}, {transform_indices = @transform_1, window_bounds = array<i64: 128, 128>}, {transform_indices = @transform_2, window_bounds = array<i64: 1, 128>}, {transform_indices = @transform_3, window_bounds = array<i64: 128, 1>}, {transform_indices = @transform_4, window_bounds = array<i64: 1, 128>}]} {
    %c0_i32 = arith.constant 0 : i32
    %0 = arith.cmpi eq, %arg1, %c0_i32 : i32
    %1 = arith.extui %0 : i1 to i32
    %c0_i32_0 = arith.constant 0 : i32
    %2 = arith.cmpi ne, %1, %c0_i32_0 : i32
    scf.if %2 {
      %cst_34 = arith.constant 0xFF800000 : f32
      %61 = vector.broadcast %cst_34 : f32 to vector<1x128xf32>
      %c0_35 = arith.constant 0 : index
      %c0_36 = arith.constant 0 : index
      %62 = vector.load %arg7[%c0_35, %c0_36] : memref<1x128xf32, #tpu.memory_space<vmem>>, vector<1x128xf32>
      tpu.vector_store %arg7[%c0_35, %c0_36], %61 {strides = array<i32>} : memref<1x128xf32, #tpu.memory_space<vmem>>, vector<1x128xf32>,
      %cst_37 = arith.constant 0.000000e+00 : f32
      %63 = vector.broadcast %cst_37 : f32 to vector<1x128xf32>
      %c0_38 = arith.constant 0 : index
      %c0_39 = arith.constant 0 : index
      %64 = vector.load %arg8[%c0_38, %c0_39] : memref<1x128xf32, #tpu.memory_space<vmem>>, vector<1x128xf32>
      tpu.vector_store %arg8[%c0_38, %c0_39], %63 {strides = array<i32>} : memref<1x128xf32, #tpu.memory_space<vmem>>, vector<1x128xf32>,
      %cst_40 = arith.constant 0.000000e+00 : f32
      %65 = vector.broadcast %cst_40 : f32 to vector<1x128xf32>
      %c0_41 = arith.constant 0 : index
      %c0_42 = arith.constant 0 : index
      %66 = vector.load %arg9[%c0_41, %c0_42] : memref<1x128xf32, #tpu.memory_space<vmem>>, vector<1x128xf32>
      tpu.vector_store %arg9[%c0_41, %c0_42], %65 {strides = array<i32>} : memref<1x128xf32, #tpu.memory_space<vmem>>, vector<1x128xf32>,
      %cst_43 = arith.constant 0.000000e+00 : f32
      %67 = vector.broadcast %cst_43 : f32 to vector<1x128xf32>
      %c0_44 = arith.constant 0 : index
      %c0_45 = arith.constant 0 : index
      %68 = vector.load %arg10[%c0_44, %c0_45] : memref<1x128xf32, #tpu.memory_space<vmem>>, vector<1x128xf32>
      tpu.vector_store %arg10[%c0_44, %c0_45], %67 {strides = array<i32>} : memref<1x128xf32, #tpu.memory_space<vmem>>, vector<1x128xf32>,
    } else {
    }
    %c0 = arith.constant 0 : index
    %c0_1 = arith.constant 0 : index
    %3 = vector.load %arg3[%c0, %c0_1] : memref<128x128xbf16, #tpu.memory_space<vmem>>, vector<128x128xbf16>
    %c0_2 = arith.constant 0 : index
    %c0_3 = arith.constant 0 : index
    %4 = vector.load %arg2[%c0_2, %c0_3] : memref<128x128xbf16, #tpu.memory_space<vmem>>, vector<128x128xbf16>
    %cst = arith.constant dense<0.000000e+00> : vector<128x128xf32>
    %5 = tpu.matmul %3, %4, %cst {dimension_numbers = #tpu.dot_dimension_numbers<[1], [1], [0], [0], [0, 0, 1, 0], [], []>} : vector<128x128xbf16>, vector<128x128xbf16>, vector<128x128xf32> -> vector<128x128xf32>
    %cst_4 = arith.constant 14.2857141 : f32
    %6 = vector.broadcast %cst_4 : f32 to vector<128x128xf32>
    %7 = arith.mulf %5, %6 : vector<128x128xf32>
    %c128_i32 = arith.constant 128 : i32
    %8 = arith.muli %arg1, %c128_i32 : i32
    %9 = tpu.iota {dimensions = array<i32: 0>} : vector<128x128xi32>
    %10 = vector.broadcast %8 : i32 to vector<128x128xi32>
    %11 = arith.addi %10, %9 : vector<128x128xi32>
    %c128_i32_5 = arith.constant 128 : i32
    %12 = arith.muli %arg0, %c128_i32_5 : i32
    %13 = tpu.iota {dimensions = array<i32: 1>} : vector<128x128xi32>
    %14 = vector.broadcast %12 : i32 to vector<128x128xi32>
    %15 = arith.addi %14, %13 : vector<128x128xi32>
    %16 = arith.cmpi ne, %11, %15 : vector<128x128xi32>
    %c16_i32 = arith.constant 16 : i32
    %17 = vector.broadcast %c16_i32 : i32 to vector<128x128xi32>
    %18 = arith.cmpi slt, %11, %17 : vector<128x128xi32>
    %19 = arith.andi %16, %18 : vector<128x128xi1>
    %c0_6 = arith.constant 0 : index
    %c0_7 = arith.constant 0 : index
    %20 = vector.load %arg5[%c0_6, %c0_7] : memref<128x1xi32, #tpu.memory_space<vmem>>, vector<128x1xi32>
    %c0_8 = arith.constant 0 : index
    %c0_9 = arith.constant 0 : index
    %21 = vector.load %arg4[%c0_8, %c0_9] : memref<1x128xi32, #tpu.memory_space<vmem>>, vector<1x128xi32>
    %22 = vector.broadcast %20 : vector<128x1xi32> to vector<128x128xi32>
    %23 = vector.broadcast %21 : vector<1x128xi32> to vector<128x128xi32>
    %24 = arith.cmpi eq, %22, %23 : vector<128x128xi32>
    %25 = arith.andi %24, %19 : vector<128x128xi1>
    %c0_10 = arith.constant 0 : index
    %c0_11 = arith.constant 0 : index
    %26 = vector.load %arg7[%c0_10, %c0_11] : memref<1x128xf32, #tpu.memory_space<vmem>>, vector<1x128xf32>
    %cst_12 = arith.constant dense<0xFF800000> : vector<128xf32>
    %27 = vector.multi_reduction <maximumf>, %7, %cst_12 [0] : vector<128x128xf32> to vector<128xf32>
    %28 = vector.shape_cast %27 : vector<128xf32> to vector<1x128xf32>
    %29 = arith.maximumf %26, %28 : vector<1x128xf32>
    %30 = arith.subf %26, %29 : vector<1x128xf32>
    %31 = math.exp %30 : vector<1x128xf32>
    %32 = vector.broadcast %29 : vector<1x128xf32> to vector<128x128xf32>
    %33 = arith.subf %7, %32 : vector<128x128xf32>
    %34 = math.exp %33 : vector<128x128xf32>
    %cst_13 = arith.constant 0.000000e+00 : f32
    %35 = vector.broadcast %cst_13 : f32 to vector<128x128xf32>
    %36 = arith.select %19, %34, %35 : vector<128x128xi1>, vector<128x128xf32>
    %c0_14 = arith.constant 0 : index
    %c0_15 = arith.constant 0 : index
    %37 = vector.load %arg8[%c0_14, %c0_15] : memref<1x128xf32, #tpu.memory_space<vmem>>, vector<1x128xf32>
    %38 = arith.mulf %31, %37 : vector<1x128xf32>
    %cst_16 = arith.constant dense<0.000000e+00> : vector<128xf32>
    %39 = vector.multi_reduction <add>, %36, %cst_16 [0] : vector<128x128xf32> to vector<128xf32>
    %40 = vector.shape_cast %39 : vector<128xf32> to vector<1x128xf32>
    %41 = arith.addf %38, %40 : vector<1x128xf32>
    %c0_17 = arith.constant 0 : index
    %c0_18 = arith.constant 0 : index
    %42 = vector.load %arg8[%c0_17, %c0_18] : memref<1x128xf32, #tpu.memory_space<vmem>>, vector<1x128xf32>
    tpu.vector_store %arg8[%c0_17, %c0_18], %41 {strides = array<i32>} : memref<1x128xf32, #tpu.memory_space<vmem>>, vector<1x128xf32>,
    %c0_19 = arith.constant 0 : index
    %c0_20 = arith.constant 0 : index
    %43 = vector.load %arg9[%c0_19, %c0_20] : memref<1x128xf32, #tpu.memory_space<vmem>>, vector<1x128xf32>
    %cst_21 = arith.constant 0.000000e+00 : f32
    %44 = vector.broadcast %cst_21 : f32 to vector<128x128xf32>
    %45 = arith.select %25, %7, %44 : vector<128x128xi1>, vector<128x128xf32>
    %cst_22 = arith.constant dense<0.000000e+00> : vector<128xf32>
    %46 = vector.multi_reduction <add>, %45, %cst_22 [0] : vector<128x128xf32> to vector<128xf32>
    %47 = vector.shape_cast %46 : vector<128xf32> to vector<1x128xf32>
    %48 = arith.addf %43, %47 : vector<1x128xf32>
    %c0_23 = arith.constant 0 : index
    %c0_24 = arith.constant 0 : index
    %49 = vector.load %arg9[%c0_23, %c0_24] : memref<1x128xf32, #tpu.memory_space<vmem>>, vector<1x128xf32>
    tpu.vector_store %arg9[%c0_23, %c0_24], %48 {strides = array<i32>} : memref<1x128xf32, #tpu.memory_space<vmem>>, vector<1x128xf32>,
    %c0_25 = arith.constant 0 : index
    %c0_26 = arith.constant 0 : index
    %50 = vector.load %arg10[%c0_25, %c0_26] : memref<1x128xf32, #tpu.memory_space<vmem>>, vector<1x128xf32>
    %51 = arith.extui %25 : vector<128x128xi1> to vector<128x128xi32>
    %52 = arith.sitofp %51 : vector<128x128xi32> to vector<128x128xf32>
    %cst_27 = arith.constant dense<0.000000e+00> : vector<128xf32>
    %53 = vector.multi_reduction <add>, %52, %cst_27 [0] : vector<128x128xf32> to vector<128xf32>
    %54 = vector.shape_cast %53 : vector<128xf32> to vector<1x128xf32>
    %55 = arith.addf %50, %54 : vector<1x128xf32>
    %c0_28 = arith.constant 0 : index
    %c0_29 = arith.constant 0 : index
    %56 = vector.load %arg10[%c0_28, %c0_29] : memref<1x128xf32, #tpu.memory_space<vmem>>, vector<1x128xf32>
    tpu.vector_store %arg10[%c0_28, %c0_29], %55 {strides = array<i32>} : memref<1x128xf32, #tpu.memory_space<vmem>>, vector<1x128xf32>,
    %c0_30 = arith.constant 0 : index
    %c0_31 = arith.constant 0 : index
    %57 = vector.load %arg7[%c0_30, %c0_31] : memref<1x128xf32, #tpu.memory_space<vmem>>, vector<1x128xf32>
    tpu.vector_store %arg7[%c0_30, %c0_31], %29 {strides = array<i32>} : memref<1x128xf32, #tpu.memory_space<vmem>>, vector<1x128xf32>,
    %c0_i32_32 = arith.constant 0 : i32
    %58 = arith.cmpi eq, %arg1, %c0_i32_32 : i32
    %59 = arith.extui %58 : i1 to i32
    %c0_i32_33 = arith.constant 0 : i32
    %60 = arith.cmpi ne, %59, %c0_i32_33 : i32
    scf.if %60 {
      %c0_34 = arith.constant 0 : index
      %c0_35 = arith.constant 0 : index
      %61 = vector.load %arg7[%c0_34, %c0_35] : memref<1x128xf32, #tpu.memory_space<vmem>>, vector<1x128xf32>
      %c0_36 = arith.constant 0 : index
      %c0_37 = arith.constant 0 : index
      %62 = vector.load %arg8[%c0_36, %c0_37] : memref<1x128xf32, #tpu.memory_space<vmem>>, vector<1x128xf32>
      %63 = math.log %62 : vector<1x128xf32>
      %64 = arith.addf %61, %63 : vector<1x128xf32>
      %c0_38 = arith.constant 0 : index
      %c0_39 = arith.constant 0 : index
      %65 = vector.load %arg10[%c0_38, %c0_39] : memref<1x128xf32, #tpu.memory_space<vmem>>, vector<1x128xf32>
      %cst_40 = arith.constant 0.000000e+00 : f32
      %66 = vector.broadcast %cst_40 : f32 to vector<1x128xf32>
      %67 = arith.cmpf ogt, %65, %66 : vector<1x128xf32>
      %cst_41 = arith.constant 1.000000e+00 : f32
      %68 = vector.broadcast %cst_41 : f32 to vector<1x128xf32>
      %69 = arith.select %67, %65, %68 : vector<1x128xi1>, vector<1x128xf32>
      %c0_42 = arith.constant 0 : index
      %c0_43 = arith.constant 0 : index
      %70 = vector.load %arg9[%c0_42, %c0_43] : memref<1x128xf32, #tpu.memory_space<vmem>>, vector<1x128xf32>
      %71 = arith.mulf %65, %64 : vector<1x128xf32>
      %72 = arith.subf %70, %71 : vector<1x128xf32>
      %73 = arith.divf %72, %69 : vector<1x128xf32>
      %cst_44 = arith.constant -1.000000e+00 : f32
      %74 = vector.broadcast %cst_44 : f32 to vector<1x128xf32>
      %75 = arith.mulf %74, %73 : vector<1x128xf32>
      %c0_45 = arith.constant 0 : index
      %c0_46 = arith.constant 0 : index
      %76 = vector.load %arg6[%c0_45, %c0_46] : memref<1x128xf32, #tpu.memory_space<vmem>>, vector<1x128xf32>
      tpu.vector_store %arg6[%c0_45, %c0_46], %75 {strides = array<i32>} : memref<1x128xf32, #tpu.memory_space<vmem>>, vector<1x128xf32>,
    } else {
    }
    return
  }
  func.func @transform_0(%arg0: i32, %arg1: i32) -> (i32, i32) {
    %c0_i32 = arith.constant 0 : i32
    %c0_i32_0 = arith.constant 0 : i32
    return %arg0, %c0_i32 : i32, i32
  }
  func.func @transform_1(%arg0: i32, %arg1: i32) -> (i32, i32) {
    %c0_i32 = arith.constant 0 : i32
    %c0_i32_0 = arith.constant 0 : i32
    return %arg1, %c0_i32 : i32, i32
  }
  func.func @transform_2(%arg0: i32, %arg1: i32) -> (i32, i32) {
    %c0_i32 = arith.constant 0 : i32
    %c0_i32_0 = arith.constant 0 : i32
    return %c0_i32, %arg0 : i32, i32
  }
  func.func @transform_3(%arg0: i32, %arg1: i32) -> (i32, i32) {
    %c0_i32 = arith.constant 0 : i32
    %c0_i32_0 = arith.constant 0 : i32
    return %arg1, %c0_i32 : i32, i32
  }
  func.func @transform_4(%arg0: i32, %arg1: i32) -> (i32, i32) {
    %c0_i32 = arith.constant 0 : i32
    %c0_i32_0 = arith.constant 0 : i32
    return %c0_i32, %arg0 : i32, i32
  }
}

</mosaic_0001>

<llo_original>
// kernel: tpu_custom_call.1
$region0: #{tpu_custom_call.1}
  #allocation0 [shape = 'u32[]', space=smem, size = 0x4, offset = 0x4, fixed_abs, tag = 'smem constant byte address 0x4 - core index']
  #allocation1 [shape = 'u32[144,128]{1,0:T(1,128)}', space=vmem, size = 0x12000, scoped, tag = 'internal scratch']
  #allocation2 [shape = 'f32[1,128]{1,0:T(1,128)}', space=vmem, size = 0x200, scoped, tag = 'scratch operand']
  #allocation3 [shape = 'f32[1,128]{1,0:T(1,128)}', space=vmem, size = 0x200, scoped, tag = 'scratch operand']
  #allocation4 [shape = 'f32[1,128]{1,0:T(1,128)}', space=vmem, size = 0x200, scoped, tag = 'scratch operand']
  #allocation5 [shape = 'f32[1,128]{1,0:T(1,128)}', space=vmem, size = 0x200, scoped, tag = 'scratch operand']
  %s0 = inlined_call_operand.vmem [shape: bf16[128,128], index: 0, kind: input, shape index: {}]
  %s1 = inlined_call_operand.vmem [shape: bf16[128,128], index: 1, kind: input, shape index: {}]
  %s2 = inlined_call_operand.vmem [shape: s32[1,128], index: 2, kind: input, shape index: {}]
  %s3 = inlined_call_operand.vmem [shape: s32[128,1], index: 3, kind: input, shape index: {}]
  %s4 = inlined_call_operand.hbm [shape: f32[1,128], index: 4, kind: output, shape index: {}]
  %s5 = sld [smem:[#allocation0]]
  $region34: #{tpu_custom_call.1} parent=0
    _
  %s7 = ssub.s32 1, %s5
  %s8 = scalar_select 0, %s7, %s5
  $region1: #{tpu_custom_call.1} parent=0
    #allocation6 [shape = 'u8[512]{0}', space=vmem, size = 0x400, scoped, tag = 'output window, operand 0, single buffered']
    #allocation7 [shape = 's32[1]{0}', space=sflag, size = 0x4, scoped, tag = 'scoped memory for tpu_custom_call.1']
    %9 = vsyncpa [#allocation7], 0
    // Predicated region
    $region2: #{tpu_custom_call.1} parent=1 // pred_check
      _
    $region3: #{tpu_custom_call.1} parent=1 // pred_check_branch
      %11 = sbr.rel (0) target = $region5
    $region4: #{tpu_custom_call.1} parent=1 // pred_region
      _
    $region5: #{tpu_custom_call.1} parent=1 // pred_fallthru
      _
    // Predicated region
    $region6: #{tpu_custom_call.1} parent=1 // pred_check
      _
    $region7: #{tpu_custom_call.1} parent=1 // pred_check_branch
      %13 = sbr.rel (0) target = $region9
    $region8: #{tpu_custom_call.1} parent=1 // pred_region
      _
    $region9: #{tpu_custom_call.1} parent=1 // pred_fallthru
      _
    // Predicated region
    $region10: #{tpu_custom_call.1} parent=1 // pred_check
      _
    $region11: #{tpu_custom_call.1} parent=1 // pred_check_branch
      %15 = sbr.rel (0) target = $region13
    $region12: #{tpu_custom_call.1} parent=1 // pred_region
      _
    $region13: #{tpu_custom_call.1} parent=1 // pred_fallthru
      _
    // Predicated region
    $region14: #{tpu_custom_call.1} parent=1 // pred_check
      _
    $region15: #{tpu_custom_call.1} parent=1 // pred_check_branch
      %17 = sbr.rel (0) target = $region17
    $region16: #{tpu_custom_call.1} parent=1 // pred_region
      _
    $region17: #{tpu_custom_call.1} parent=1 // pred_fallthru
      _
    %p19 = scmp.eq.s32.totalorder 0, 0
    // Predicated region
    $region18: #{tpu_custom_call.1} parent=1 // pred_check
      %p20 = pneg %p19
    $region19: #{tpu_custom_call.1} parent=1 // pred_check_branch
      %22 = sbr.rel (%p20) target = $region21
    $region20: #{tpu_custom_call.1} parent=1 // pred_region
      %23 = vst [vmem:[#allocation2] sm:$0x1] -inf
      %24 = vst [vmem:[#allocation3] sm:$0x1] 0.0
      %25 = vst [vmem:[#allocation4] sm:$0x1] 0.0
      %26 = vst [vmem:[#allocation5] sm:$0x1] 0.0
    $region21: #{tpu_custom_call.1} parent=1 // pred_fallthru
      _
    %v27 = vld [vmem:[%s1] sm:$0xf]
    %v28 = vld [vmem:[%s1 + $0x4] sm:$0xf]
    %v29 = vld [vmem:[%s1 + $0x8] sm:$0xf]
    %v30 = vld [vmem:[%s1 + $0xc] sm:$0xf]
    %v31 = vld [vmem:[%s1 + $0x10] sm:$0xf]
    %v32 = vld [vmem:[%s1 + $0x14] sm:$0xf]
    %v33 = vld [vmem:[%s1 + $0x18] sm:$0xf]
    %v34 = vld [vmem:[%s1 + $0x1c] sm:$0xf]
    %v35 = vld [vmem:[%s1 + $0x20] sm:$0xf]
    %v36 = vld [vmem:[%s1 + $0x24] sm:$0xf]
    %v37 = vld [vmem:[%s1 + $0x28] sm:$0xf]
    %v38 = vld [vmem:[%s1 + $0x2c] sm:$0xf]
    %v39 = vld [vmem:[%s1 + $0x30] sm:$0xf]
    %v40 = vld [vmem:[%s1 + $0x34] sm:$0xf]
    %v41 = vld [vmem:[%s1 + $0x38] sm:$0xf]
    %v42 = vld [vmem:[%s1 + $0x3c] sm:$0xf]
    %v43 = vld [vmem:[%s0] sm:$0xf]
    %v44 = vld [vmem:[%s0 + $0x4] sm:$0xf]
    %v45 = vld [vmem:[%s0 + $0x8] sm:$0xf]
    %v46 = vld [vmem:[%s0 + $0xc] sm:$0xf]
    %v47 = vld [vmem:[%s0 + $0x10] sm:$0xf]
    %v48 = vld [vmem:[%s0 + $0x14] sm:$0xf]
    %v49 = vld [vmem:[%s0 + $0x18] sm:$0xf]
    %v50 = vld [vmem:[%s0 + $0x1c] sm:$0xf]
    %v51 = vld [vmem:[%s0 + $0x20] sm:$0xf]
    %v52 = vld [vmem:[%s0 + $0x24] sm:$0xf]
    %v53 = vld [vmem:[%s0 + $0x28] sm:$0xf]
    %v54 = vld [vmem:[%s0 + $0x2c] sm:$0xf]
    %v55 = vld [vmem:[%s0 + $0x30] sm:$0xf]
    %v56 = vld [vmem:[%s0 + $0x34] sm:$0xf]
    %v57 = vld [vmem:[%s0 + $0x38] sm:$0xf]
    %v58 = vld [vmem:[%s0 + $0x3c] sm:$0xf]
    %v75 = vunpack.c.l.b16 %v27
    %v76 = vunpack.c.l.b16 %v28
    %v77 = vunpack.c.l.b16 %v29
    %v78 = vunpack.c.l.b16 %v30
    %v79 = vunpack.c.l.b16 %v31
    %v80 = vunpack.c.l.b16 %v32
    %v81 = vunpack.c.l.b16 %v33
    %v82 = vunpack.c.l.b16 %v34
    %v83 = vunpack.c.l.b16 %v35
    %v84 = vunpack.c.l.b16 %v36
    %v85 = vunpack.c.l.b16 %v37
    %v86 = vunpack.c.l.b16 %v38
    %v87 = vunpack.c.l.b16 %v39
    %v88 = vunpack.c.l.b16 %v40
    %v89 = vunpack.c.l.b16 %v41
    %v90 = vunpack.c.l.b16 %v42
    %v91 = vpack.c.b16 %v76, %v75
    %v92 = vpack.c.b16 %v78, %v77
    %v93 = vpack.c.b16 %v80, %v79
    %v94 = vpack.c.b16 %v82, %v81
    %v95 = vpack.c.b16 %v84, %v83
    %v96 = vpack.c.b16 %v86, %v85
    %v97 = vpack.c.b16 %v88, %v87
    %v98 = vpack.c.b16 %v90, %v89
    %v123 = vunpack.c.l.b16 %v43
    %v124 = vunpack.c.l.b16 %v44
    %v125 = vunpack.c.l.b16 %v45
    %v126 = vunpack.c.l.b16 %v46
    %v127 = vunpack.c.l.b16 %v47
    %v128 = vunpack.c.l.b16 %v48
    %v129 = vunpack.c.l.b16 %v49
    %v130 = vunpack.c.l.b16 %v50
    %v131 = vunpack.c.l.b16 %v51
    %v132 = vunpack.c.l.b16 %v52
    %v133 = vunpack.c.l.b16 %v53
    %v134 = vunpack.c.l.b16 %v54
    %v135 = vunpack.c.l.b16 %v55
    %v136 = vunpack.c.l.b16 %v56
    %v137 = vunpack.c.l.b16 %v57
    %v138 = vunpack.c.l.b16 %v58
    %v139 = vpack.c.b16 %v124, %v123
    %v140 = vpack.c.b16 %v126, %v125
    %v141 = vpack.c.b16 %v128, %v127
    %v142 = vpack.c.b16 %v130, %v129
    %v143 = vpack.c.b16 %v132, %v131
    %v144 = vpack.c.b16 %v134, %v133
    %v145 = vpack.c.b16 %v136, %v135
    %v146 = vpack.c.b16 %v138, %v137
    %155 = vmatprep.subr.bf16.mxu0 0
    %156 = vmatpush1.bf16.xpose.msra.mxu0 %v146
    %157 = vmatprep.subr.bf16.mxu0 0
    %158 = vmatpush1.bf16.xpose.msra.mxu0 %v145
    %159 = vmatprep.subr.bf16.mxu0 0
    %160 = vmatpush1.bf16.xpose.msra.mxu0 %v144
    %161 = vmatprep.subr.bf16.mxu0 0
    %162 = vmatpush1.bf16.xpose.msra.mxu0 %v143
    %163 = vmatprep.subr.bf16.mxu0 0
    %164 = vmatpush1.bf16.xpose.msra.mxu0 %v142
    %165 = vmatprep.subr.bf16.mxu0 0
    %166 = vmatpush1.bf16.xpose.msra.mxu0 %v141
    %167 = vmatprep.subr.bf16.mxu0 0
    %168 = vmatpush1.bf16.xpose.msra.mxu0 %v140
    %169 = vmatprep.subr.bf16.mxu0 0
    %170 = vmatpush1.bf16.xpose.msra.mxu0 %v139
    %171 = vmatprep.subr.bf16.mxu0 0
    %172 = vmatpush2.bf16.xpose.msra.mxu0 0
    %173 = vmatprep.subr.bf16.mxu0 0
    %174 = vmatpush2.bf16.xpose.msra.mxu0 0
    %175 = vmatprep.subr.bf16.mxu0 0
    %176 = vmatpush2.bf16.xpose.msra.mxu0 0
    %177 = vmatprep.subr.bf16.mxu0 0
    %178 = vmatpush2.bf16.xpose.msra.mxu0 0
    %179 = vmatprep.subr.bf16.mxu0 0
    %180 = vmatpush2.bf16.xpose.msra.mxu0 0
    %181 = vmatprep.subr.bf16.mxu0 0
    %182 = vmatpush2.bf16.xpose.msra.mxu0 0
    %183 = vmatprep.subr.bf16.mxu0 0
    %184 = vmatpush2.bf16.xpose.msra.mxu0 0
    %185 = vmatprep.subr.bf16.mxu0 0
    %186 = vmatpush2.bf16.xpose.msra.mxu0 0
    %187 = vmatprep.mubr.bf16.mxu0 0
    %188 = vmatmul.mubr.bf16.gmra.mxu0 %v91
    %v189 = vpop.f32.mrf.mxu0
    %v190 = vadd.f32 0.0, %v189
    %v191 = vpop.f32.mrf.mxu0
    %v192 = vpop.f32.mrf.mxu0
    %v193 = vadd.f32 0.0, %v192
    %v194 = vpop.f32.mrf.mxu0
    %195 = vmatprep.mubr.bf16.mxu0 0
    %196 = vmatmul.mubr.bf16.gmra.mxu0 %v92
    %v197 = vpop.f32.mrf.mxu0
    %v198 = vadd.f32 0.0, %v197
    %v199 = vpop.f32.mrf.mxu0
    %v200 = vpop.f32.mrf.mxu0
    %v201 = vadd.f32 0.0, %v200
    %v202 = vpop.f32.mrf.mxu0
    %203 = vmatprep.mubr.bf16.mxu0 0
    %204 = vmatmul.mubr.bf16.gmra.mxu0 %v93
    %v205 = vpop.f32.mrf.mxu0
    %v206 = vadd.f32 0.0, %v205
    %v207 = vpop.f32.mrf.mxu0
    %v208 = vpop.f32.mrf.mxu0
    %v209 = vadd.f32 0.0, %v208
    %v210 = vpop.f32.mrf.mxu0
    %211 = vmatprep.mubr.bf16.mxu0 0
    %212 = vmatmul.mubr.bf16.gmra.mxu0 %v94
    %v213 = vpop.f32.mrf.mxu0
    %v214 = vadd.f32 0.0, %v213
    %v215 = vpop.f32.mrf.mxu0
    %v216 = vpop.f32.mrf.mxu0
    %v217 = vadd.f32 0.0, %v216
    %v218 = vpop.f32.mrf.mxu0
    %219 = vmatprep.mubr.bf16.mxu0 0
    %220 = vmatmul.mubr.bf16.gmra.mxu0 %v95
    %v221 = vpop.f32.mrf.mxu0
    %v222 = vadd.f32 0.0, %v221
    %v223 = vpop.f32.mrf.mxu0
    %v224 = vpop.f32.mrf.mxu0
    %v225 = vadd.f32 0.0, %v224
    %v226 = vpop.f32.mrf.mxu0
    %227 = vmatprep.mubr.bf16.mxu0 0
    %228 = vmatmul.mubr.bf16.gmra.mxu0 %v96
    %v229 = vpop.f32.mrf.mxu0
    %v230 = vadd.f32 0.0, %v229
    %v231 = vpop.f32.mrf.mxu0
    %v232 = vpop.f32.mrf.mxu0
    %v233 = vadd.f32 0.0, %v232
    %v234 = vpop.f32.mrf.mxu0
    %235 = vmatprep.mubr.bf16.mxu0 0
    %236 = vmatmul.mubr.bf16.gmra.mxu0 %v97
    %v237 = vpop.f32.mrf.mxu0
    %v238 = vadd.f32 0.0, %v237
    %v239 = vpop.f32.mrf.mxu0
    %v240 = vpop.f32.mrf.mxu0
    %v241 = vadd.f32 0.0, %v240
    %v242 = vpop.f32.mrf.mxu0
    %243 = vmatprep.mubr.bf16.mxu0 0
    %244 = vmatmul.mubr.bf16.gmra.mxu0 %v98
    %v245 = vpop.f32.mrf.mxu0
    %v246 = vadd.f32 0.0, %v245
    %v247 = vpop.f32.mrf.mxu0
    %v248 = vpop.f32.mrf.mxu0
    %v249 = vadd.f32 0.0, %v248
    %v250 = vpop.f32.mrf.mxu0
    %251 = vdwg.mxu0
    %v252 = vmul.f32 %v190, 14.285714
    %v253 = vmul.f32 %v193, 14.285714
    %v254 = vmul.f32 %v198, 14.285714
    %v255 = vmul.f32 %v201, 14.285714
    %v256 = vmul.f32 %v206, 14.285714
    %v257 = vmul.f32 %v209, 14.285714
    %v258 = vmul.f32 %v214, 14.285714
    %v259 = vmul.f32 %v217, 14.285714
    %v260 = vmul.f32 %v222, 14.285714
    %v261 = vmul.f32 %v225, 14.285714
    %v262 = vmul.f32 %v230, 14.285714
    %v263 = vmul.f32 %v233, 14.285714
    %v264 = vmul.f32 %v238, 14.285714
    %v265 = vmul.f32 %v241, 14.285714
    %v266 = vmul.f32 %v246, 14.285714
    %v267 = vmul.f32 %v249, 14.285714
    %s268 = smul.u32 0, 128
    %v269 = vlaneseq
    %v270 = vshrl.u32 %v269, 7
    %v271 = vadd.s32 %v270, 8
    %v272 = vadd.s32 %v270, 16
    %v273 = vadd.s32 %v270, 24
    %v274 = vadd.s32 %v270, 32
    %v275 = vadd.s32 %v270, 40
    %v276 = vadd.s32 %v270, 48
    %v277 = vadd.s32 %v270, 56
    %v278 = vadd.s32 %v270, 64
    %v279 = vadd.s32 %v270, 72
    %v280 = vadd.s32 %v270, 80
    %v281 = vadd.s32 %v270, 88
    %v282 = vadd.s32 %v270, 96
    %v283 = vadd.s32 %v270, 104
    %v284 = vadd.s32 %v270, 112
    %v285 = vadd.s32 %v270, 120
    %v286 = vstv %s268
    %v287 = vadd.s32 %v286, %v270
    %v288 = vadd.s32 %v286, %v271
    %v289 = vadd.s32 %v286, %v272
    %v290 = vadd.s32 %v286, %v273
    %v291 = vadd.s32 %v286, %v274
    %v292 = vadd.s32 %v286, %v275
    %v293 = vadd.s32 %v286, %v276
    %v294 = vadd.s32 %v286, %v277
    %v295 = vadd.s32 %v286, %v278
    %v296 = vadd.s32 %v286, %v279
    %v297 = vadd.s32 %v286, %v280
    %v298 = vadd.s32 %v286, %v281
    %v299 = vadd.s32 %v286, %v282
    %v300 = vadd.s32 %v286, %v283
    %v301 = vadd.s32 %v286, %v284
    %v302 = vadd.s32 %v286, %v285
    %s303 = smul.u32 0, 128
    %v304 = vlaneseq
    %v305 = vand.u32 %v304, 127
    %v306 = vstv %s303
    %v307 = vadd.s32 %v306, %v305
    %vm308 = vcmp.ne.s32.totalorder %v287, %v307
    %vm309 = vcmp.ne.s32.totalorder %v288, %v307
    %vm310 = vcmp.ne.s32.totalorder %v289, %v307
    %vm311 = vcmp.ne.s32.totalorder %v290, %v307
    %vm312 = vcmp.ne.s32.totalorder %v291, %v307
    %vm313 = vcmp.ne.s32.totalorder %v292, %v307
    %vm314 = vcmp.ne.s32.totalorder %v293, %v307
    %vm315 = vcmp.ne.s32.totalorder %v294, %v307
    %vm316 = vcmp.ne.s32.totalorder %v295, %v307
    %vm317 = vcmp.ne.s32.totalorder %v296, %v307
    %vm318 = vcmp.ne.s32.totalorder %v297, %v307
    %vm319 = vcmp.ne.s32.totalorder %v298, %v307
    %vm320 = vcmp.ne.s32.totalorder %v299, %v307
    %vm321 = vcmp.ne.s32.totalorder %v300, %v307
    %vm322 = vcmp.ne.s32.totalorder %v301, %v307
    %vm323 = vcmp.ne.s32.totalorder %v302, %v307
    %vm324 = vcmp.lt.s32.totalorder %v287, 16
    %vm325 = vcmp.lt.s32.totalorder %v288, 16
    %vm326 = vcmp.lt.s32.totalorder %v289, 16
    %vm327 = vcmp.lt.s32.totalorder %v290, 16
    %vm328 = vcmp.lt.s32.totalorder %v291, 16
    %vm329 = vcmp.lt.s32.totalorder %v292, 16
    %vm330 = vcmp.lt.s32.totalorder %v293, 16
    %vm331 = vcmp.lt.s32.totalorder %v294, 16
    %vm332 = vcmp.lt.s32.totalorder %v295, 16
    %vm333 = vcmp.lt.s32.totalorder %v296, 16
    %vm334 = vcmp.lt.s32.totalorder %v297, 16
    %vm335 = vcmp.lt.s32.totalorder %v298, 16
    %vm336 = vcmp.lt.s32.totalorder %v299, 16
    %vm337 = vcmp.lt.s32.totalorder %v300, 16
    %vm338 = vcmp.lt.s32.totalorder %v301, 16
    %vm339 = vcmp.lt.s32.totalorder %v302, 16
    %vm340 = vmand %vm308, %vm324
    %vm341 = vmand %vm309, %vm325
    %vm342 = vmand %vm310, %vm326
    %vm343 = vmand %vm311, %vm327
    %vm344 = vmand %vm312, %vm328
    %vm345 = vmand %vm313, %vm329
    %vm346 = vmand %vm314, %vm330
    %vm347 = vmand %vm315, %vm331
    %vm348 = vmand %vm316, %vm332
    %vm349 = vmand %vm317, %vm333
    %vm350 = vmand %vm318, %vm334
    %vm351 = vmand %vm319, %vm335
    %vm352 = vmand %vm320, %vm336
    %vm353 = vmand %vm321, %vm337
    %vm354 = vmand %vm322, %vm338
    %vm355 = vmand %vm323, %vm339
    %v356 = vld [vmem:[%s3] sm:$0xff]
    %v357 = vld [vmem:[%s3 + $0x8] sm:$0xff]
    %v358 = vld [vmem:[%s3 + $0x10] sm:$0xff]
    %v359 = vld [vmem:[%s3 + $0x18] sm:$0xff]
    %v360 = vld [vmem:[%s3 + $0x20] sm:$0xff]
    %v361 = vld [vmem:[%s3 + $0x28] sm:$0xff]
    %v362 = vld [vmem:[%s3 + $0x30] sm:$0xff]
    %v363 = vld [vmem:[%s3 + $0x38] sm:$0xff]
    %v364 = vld [vmem:[%s3 + $0x40] sm:$0xff]
    %v365 = vld [vmem:[%s3 + $0x48] sm:$0xff]
    %v366 = vld [vmem:[%s3 + $0x50] sm:$0xff]
    %v367 = vld [vmem:[%s3 + $0x58] sm:$0xff]
    %v368 = vld [vmem:[%s3 + $0x60] sm:$0xff]
    %v369 = vld [vmem:[%s3 + $0x68] sm:$0xff]
    %v370 = vld [vmem:[%s3 + $0x70] sm:$0xff]
    %v371 = vld [vmem:[%s3 + $0x78] sm:$0xff]
    %v372 = vld [vmem:[%s2] sm:$0x1]
    %373 = vset.pattern.permute.xlu0 0
    %374 = vperm.xlu0 %373, %v356
    %v375 = vpop.permute.xlu0 %374
    %376 = vset.pattern.permute.xlu0 0
    %377 = vperm.xlu0 %376, %v357
    %v378 = vpop.permute.xlu0 %377
    %379 = vset.pattern.permute.xlu0 0
    %380 = vperm.xlu0 %379, %v358
    %v381 = vpop.permute.xlu0 %380
    %382 = vset.pattern.permute.xlu0 0
    %383 = vperm.xlu0 %382, %v359
    %v384 = vpop.permute.xlu0 %383
    %385 = vset.pattern.permute.xlu0 0
    %386 = vperm.xlu0 %385, %v360
    %v387 = vpop.permute.xlu0 %386
    %388 = vset.pattern.permute.xlu0 0
    %389 = vperm.xlu0 %388, %v361
    %v390 = vpop.permute.xlu0 %389
    %391 = vset.pattern.permute.xlu0 0
    %392 = vperm.xlu0 %391, %v362
    %v393 = vpop.permute.xlu0 %392
    %394 = vset.pattern.permute.xlu0 0
    %395 = vperm.xlu0 %394, %v363
    %v396 = vpop.permute.xlu0 %395
    %397 = vset.pattern.permute.xlu0 0
    %398 = vperm.xlu0 %397, %v364
    %v399 = vpop.permute.xlu0 %398
    %400 = vset.pattern.permute.xlu0 0
    %401 = vperm.xlu0 %400, %v365
    %v402 = vpop.permute.xlu0 %401
    %403 = vset.pattern.permute.xlu0 0
    %404 = vperm.xlu0 %403, %v366
    %v405 = vpop.permute.xlu0 %404
    %406 = vset.pattern.permute.xlu0 0
    %407 = vperm.xlu0 %406, %v367
    %v408 = vpop.permute.xlu0 %407
    %409 = vset.pattern.permute.xlu0 0
    %410 = vperm.xlu0 %409, %v368
    %v411 = vpop.permute.xlu0 %410
    %412 = vset.pattern.permute.xlu0 0
    %413 = vperm.xlu0 %412, %v369
    %v414 = vpop.permute.xlu0 %413
    %415 = vset.pattern.permute.xlu0 0
    %416 = vperm.xlu0 %415, %v370
    %v417 = vpop.permute.xlu0 %416
    %418 = vset.pattern.permute.xlu0 0
    %419 = vperm.xlu0 %418, %v371
    %v420 = vpop.permute.xlu0 %419
    %v421 = vlaneseq
    %v422 = vshrl.u32 %v421, 7
    %v423 = vsub.s32 0, %v422
    %v424 = vrot.slane %v372, %v423
    %vm425 = vcmp.eq.s32.totalorder %v375, %v424
    %vm426 = vcmp.eq.s32.totalorder %v378, %v424
    %vm427 = vcmp.eq.s32.totalorder %v381, %v424
    %vm428 = vcmp.eq.s32.totalorder %v384, %v424
    %vm429 = vcmp.eq.s32.totalorder %v387, %v424
    %vm430 = vcmp.eq.s32.totalorder %v390, %v424
    %vm431 = vcmp.eq.s32.totalorder %v393, %v424
    %vm432 = vcmp.eq.s32.totalorder %v396, %v424
    %vm433 = vcmp.eq.s32.totalorder %v399, %v424
    %vm434 = vcmp.eq.s32.totalorder %v402, %v424
    %vm435 = vcmp.eq.s32.totalorder %v405, %v424
    %vm436 = vcmp.eq.s32.totalorder %v408, %v424
    %vm437 = vcmp.eq.s32.totalorder %v411, %v424
    %vm438 = vcmp.eq.s32.totalorder %v414, %v424
    %vm439 = vcmp.eq.s32.totalorder %v417, %v424
    %vm440 = vcmp.eq.s32.totalorder %v420, %v424
    %vm441 = vmand %vm425, %vm340
    %vm442 = vmand %vm426, %vm341
    %vm443 = vmand %vm427, %vm342
    %vm444 = vmand %vm428, %vm343
    %vm445 = vmand %vm429, %vm344
    %vm446 = vmand %vm430, %vm345
    %vm447 = vmand %vm431, %vm346
    %vm448 = vmand %vm432, %vm347
    %vm449 = vmand %vm433, %vm348
    %vm450 = vmand %vm434, %vm349
    %vm451 = vmand %vm435, %vm350
    %vm452 = vmand %vm436, %vm351
    %vm453 = vmand %vm437, %vm352
    %vm454 = vmand %vm438, %vm353
    %vm455 = vmand %vm439, %vm354
    %vm456 = vmand %vm440, %vm355
    %v457 = vld [vmem:[#allocation2] sm:$0x1]
    %v458 = vmax.f32 %v252, %v256
    %v459 = vmax.f32 %v253, %v257
    %v460 = vmax.f32 %v254, %v258
    %v461 = vmax.f32 %v255, %v259
    %v462 = vmax.f32 %v458, %v260
    %v463 = vmax.f32 %v459, %v261
    %v464 = vmax.f32 %v460, %v262
    %v465 = vmax.f32 %v461, %v263
    %v466 = vmax.f32 %v462, %v264
    %v467 = vmax.f32 %v463, %v265
    %v468 = vmax.f32 %v464, %v266
    %v469 = vmax.f32 %v465, %v267
    %v470 = vmax.f32 %v466, %v467
    %v471 = vmax.f32 %v468, %v469
    %v472 = vmax.f32 %v470, %v471
    %v473 = vrot.slane %v472, 4
    %v474 = vmax.f32 %v472, %v473
    %v475 = vrot.slane %v474, 2
    %v476 = vmax.f32 %v474, %v475
    %v477 = vrot.slane %v476, 1
    %v478 = vmax.f32 %v476, %v477
    %v479 = vmax.f32 %v457, %v478
    %v480 = vsub.f32 %v457, %v479
    %v481 = vmul.f32 %v480, 1.442695
    %v482 = vpow.pop %v481
    %v484 = vlaneseq
    %v485 = vshrl.u32 %v484, 7
    %v486 = vsub.s32 0, %v485
    %v487 = vrot.slane %v479, %v486
    %v489 = vsub.f32 %v252, %v487
    %v490 = vsub.f32 %v253, %v487
    %v491 = vsub.f32 %v254, %v487
    %v492 = vsub.f32 %v255, %v487
    %v493 = vsub.f32 %v256, %v487
    %v494 = vsub.f32 %v257, %v487
    %v495 = vsub.f32 %v258, %v487
    %v496 = vsub.f32 %v259, %v487
    %v497 = vsub.f32 %v260, %v487
    %v498 = vsub.f32 %v261, %v487
    %v499 = vsub.f32 %v262, %v487
    %v500 = vsub.f32 %v263, %v487
    %v501 = vsub.f32 %v264, %v487
    %v502 = vsub.f32 %v265, %v487
    %v503 = vsub.f32 %v266, %v487
    %v504 = vsub.f32 %v267, %v487
    %v505 = vmul.f32 %v489, 1.442695
    %v506 = vpow.pop %v505
    %v507 = vmul.f32 %v490, 1.442695
    %v508 = vpow.pop %v507
    %v509 = vmul.f32 %v491, 1.442695
    %v510 = vpow.pop %v509
    %v511 = vmul.f32 %v492, 1.442695
    %v512 = vpow.pop %v511
    %v513 = vmul.f32 %v493, 1.442695
    %v514 = vpow.pop %v513
    %v515 = vmul.f32 %v494, 1.442695
    %v516 = vpow.pop %v515
    %v517 = vmul.f32 %v495, 1.442695
    %v518 = vpow.pop %v517
    %v519 = vmul.f32 %v496, 1.442695
    %v520 = vpow.pop %v519
    %v521 = vmul.f32 %v497, 1.442695
    %v522 = vpow.pop %v521
    %v523 = vmul.f32 %v498, 1.442695
    %v524 = vpow.pop %v523
    %v525 = vmul.f32 %v499, 1.442695
    %v526 = vpow.pop %v525
    %v527 = vmul.f32 %v500, 1.442695
    %v528 = vpow.pop %v527
    %v529 = vmul.f32 %v501, 1.442695
    %v530 = vpow.pop %v529
    %v531 = vmul.f32 %v502, 1.442695
    %v532 = vpow.pop %v531
    %v533 = vmul.f32 %v503, 1.442695
    %v534 = vpow.pop %v533
    %v535 = vmul.f32 %v504, 1.442695
    %v536 = vpow.pop %v535
    %v537 = vsel %vm340, %v506, 0.0
    %v538 = vsel %vm341, %v508, 0.0
    %v539 = vsel %vm342, %v510, 0.0
    %v540 = vsel %vm343, %v512, 0.0
    %v541 = vsel %vm344, %v514, 0.0
    %v542 = vsel %vm345, %v516, 0.0
    %v543 = vsel %vm346, %v518, 0.0
    %v544 = vsel %vm347, %v520, 0.0
    %v545 = vsel %vm348, %v522, 0.0
    %v546 = vsel %vm349, %v524, 0.0
    %v547 = vsel %vm350, %v526, 0.0
    %v548 = vsel %vm351, %v528, 0.0
    %v549 = vsel %vm352, %v530, 0.0
    %v550 = vsel %vm353, %v532, 0.0
    %v551 = vsel %vm354, %v534, 0.0
    %v552 = vsel %vm355, %v536, 0.0
    %v553 = vld [vmem:[#allocation3] sm:$0x1]
    %v554 = vmul.f32 %v482, %v553
    %v555 = vadd.f32 %v537, %v538
    %v556 = vadd.f32 %v555, %v539
    %v557 = vadd.f32 %v556, %v540
    %v558 = vadd.f32 %v557, %v541
    %v559 = vadd.f32 %v558, %v542
    %v560 = vadd.f32 %v559, %v543
    %v561 = vadd.f32 %v560, %v544
    %v562 = vadd.f32 %v561, %v545
    %v563 = vadd.f32 %v562, %v546
    %v564 = vadd.f32 %v563, %v547
    %v565 = vadd.f32 %v564, %v548
    %v566 = vadd.f32 %v565, %v549
    %v567 = vadd.f32 %v566, %v550
    %v568 = vadd.f32 %v567, %v551
    %v569 = vadd.f32 %v568, %v552
    %v570 = vrot.slane %v569, 4
    %v571 = vadd.f32 %v569, %v570
    %v572 = vrot.slane %v571, 2
    %v573 = vadd.f32 %v571, %v572
    %v574 = vrot.slane %v573, 1
    %v575 = vadd.f32 %v573, %v574
    %v576 = vadd.f32 %v554, %v575
    %577 = vst [vmem:[#allocation3] sm:$0x1] %v576
    %v578 = vld [vmem:[#allocation4] sm:$0x1]
    %v579 = vsel %vm441, %v252, 0.0
    %v580 = vsel %vm442, %v253, 0.0
    %v581 = vsel %vm443, %v254, 0.0
    %v582 = vsel %vm444, %v255, 0.0
    %v583 = vsel %vm445, %v256, 0.0
    %v584 = vsel %vm446, %v257, 0.0
    %v585 = vsel %vm447, %v258, 0.0
    %v586 = vsel %vm448, %v259, 0.0
    %v587 = vsel %vm449, %v260, 0.0
    %v588 = vsel %vm450, %v261, 0.0
    %v589 = vsel %vm451, %v262, 0.0
    %v590 = vsel %vm452, %v263, 0.0
    %v591 = vsel %vm453, %v264, 0.0
    %v592 = vsel %vm454, %v265, 0.0
    %v593 = vsel %vm455, %v266, 0.0
    %v594 = vsel %vm456, %v267, 0.0
    %v595 = vadd.f32 %v579, %v580
    %v596 = vadd.f32 %v595, %v581
    %v597 = vadd.f32 %v596, %v582
    %v598 = vadd.f32 %v597, %v583
    %v599 = vadd.f32 %v598, %v584
    %v600 = vadd.f32 %v599, %v585
    %v601 = vadd.f32 %v600, %v586
    %v602 = vadd.f32 %v601, %v587
    %v603 = vadd.f32 %v602, %v588
    %v604 = vadd.f32 %v603, %v589
    %v605 = vadd.f32 %v604, %v590
    %v606 = vadd.f32 %v605, %v591
    %v607 = vadd.f32 %v606, %v592
    %v608 = vadd.f32 %v607, %v593
    %v609 = vadd.f32 %v608, %v594
    %v610 = vrot.slane %v609, 4
    %v611 = vadd.f32 %v609, %v610
    %v612 = vrot.slane %v611, 2
    %v613 = vadd.f32 %v611, %v612
    %v614 = vrot.slane %v613, 1
    %v615 = vadd.f32 %v613, %v614
    %v616 = vadd.f32 %v578, %v615
    %617 = vst [vmem:[#allocation4] sm:$0x1] %v616
    %v618 = vld [vmem:[#allocation5] sm:$0x1]
    %v619 = vsel %vm441, 1, 0
    %v620 = vsel %vm442, 1, 0
    %v621 = vsel %vm443, 1, 0
    %v622 = vsel %vm444, 1, 0
    %v623 = vsel %vm445, 1, 0
    %v624 = vsel %vm446, 1, 0
    %v625 = vsel %vm447, 1, 0
    %v626 = vsel %vm448, 1, 0
    %v627 = vsel %vm449, 1, 0
    %v628 = vsel %vm450, 1, 0
    %v629 = vsel %vm451, 1, 0
    %v630 = vsel %vm452, 1, 0
    %v631 = vsel %vm453, 1, 0
    %v632 = vsel %vm454, 1, 0
    %v633 = vsel %vm455, 1, 0
    %v634 = vsel %vm456, 1, 0
    %v635 = vcvt.s32.f32 %v619
    %v636 = vcvt.s32.f32 %v620
    %v637 = vcvt.s32.f32 %v621
    %v638 = vcvt.s32.f32 %v622
    %v639 = vcvt.s32.f32 %v623
    %v640 = vcvt.s32.f32 %v624
    %v641 = vcvt.s32.f32 %v625
    %v642 = vcvt.s32.f32 %v626
    %v643 = vcvt.s32.f32 %v627
    %v644 = vcvt.s32.f32 %v628
    %v645 = vcvt.s32.f32 %v629
    %v646 = vcvt.s32.f32 %v630
    %v647 = vcvt.s32.f32 %v631
    %v648 = vcvt.s32.f32 %v632
    %v649 = vcvt.s32.f32 %v633
    %v650 = vcvt.s32.f32 %v634
    %v651 = vadd.f32 %v635, %v636
    %v652 = vadd.f32 %v651, %v637
    %v653 = vadd.f32 %v652, %v638
    %v654 = vadd.f32 %v653, %v639
    %v655 = vadd.f32 %v654, %v640
    %v656 = vadd.f32 %v655, %v641
    %v657 = vadd.f32 %v656, %v642
    %v658 = vadd.f32 %v657, %v643
    %v659 = vadd.f32 %v658, %v644
    %v660 = vadd.f32 %v659, %v645
    %v661 = vadd.f32 %v660, %v646
    %v662 = vadd.f32 %v661, %v647
    %v663 = vadd.f32 %v662, %v648
    %v664 = vadd.f32 %v663, %v649
    %v665 = vadd.f32 %v664, %v650
    %v666 = vrot.slane %v665, 4
    %v667 = vadd.f32 %v665, %v666
    %v668 = vrot.slane %v667, 2
    %v669 = vadd.f32 %v667, %v668
    %v670 = vrot.slane %v669, 1
    %v671 = vadd.f32 %v669, %v670
    %v672 = vadd.f32 %v618, %v671
    %673 = vst [vmem:[#allocation5] sm:$0x1] %v672
    %674 = vst [vmem:[#allocation2] sm:$0x1] %v479
    // Predicated region
    $region22: #{tpu_custom_call.1} parent=1 // pred_check
      %p675 = pneg %p19
    $region23: #{tpu_custom_call.1} parent=1 // pred_check_branch
      %677 = sbr.rel (%p675) target = $region25
    $region24: #{tpu_custom_call.1} parent=1 // pred_region
      %v678 = vld [vmem:[#allocation2] sm:$0x1]
      %v679 = vld [vmem:[#allocation3] sm:$0x1]
      %v680 = vlog2.pop %v679
      %v681 = vmul.f32 %v680, 0.6931472
      %v682 = vadd.f32 %v678, %v681
      %v683 = vld [vmem:[#allocation5] sm:$0x1]
      %vm684 = vcmp.gt.f32.partialorder %v683, 0.0
      %v685 = vsel %vm684, %v683, 1.0
      %v686 = vld [vmem:[#allocation4] sm:$0x1]
      %v687 = vmul.f32 %v683, %v682
      %v688 = vsub.f32 %v686, %v687
      %v689 = vrcp.pop %v685
      %v690 = vmul.f32 %v688, %v689
      %v691 = vmul.f32 %v690, -1.0
      %692 = vst [vmem:[#allocation6] sm:$0x1] %v691
    $region25: #{tpu_custom_call.1} parent=1 // pred_fallthru
      _
    // Predicated region
    $region26: #{tpu_custom_call.1} parent=1 // pred_check
      _
    $region27: #{tpu_custom_call.1} parent=1 // pred_check_branch
      %694 = sbr.rel (0) target = $region29
    $region28: #{tpu_custom_call.1} parent=1 // pred_region
      %s696 = ssub.s32 16, 16
      %697 = vsyncadd [#allocation7], %s696
      %s699 = sshll.u32 [#allocation6], 4
      %s700 = int_to_ptr.vmem [resolvable:$true] %s699
      %702 = dma.vmem_to_hbm [thread:$0]  %s700, 16, %s4, [#allocation7]
    $region29: #{tpu_custom_call.1} parent=1 // pred_fallthru
      _
    // Predicated region
    $region30: #{tpu_custom_call.1} parent=1 // pred_check
      _
    $region31: #{tpu_custom_call.1} parent=1 // pred_check_branch
      %704 = sbr.rel (0) target = $region33
    $region32: #{tpu_custom_call.1} parent=1 // pred_region
      %705 = dma.done [#allocation7], 16
    $region33: #{tpu_custom_call.1} parent=1 // pred_fallthru
      _
    %706 = vsyncpa [#allocation7], 1

</llo_original>
